<compile_context>
chip_gen: v5e
topology: v5e:2x2
jax: 0.10.0
libtpu: 0.0.40
codegen_flags: <defaults>
</compile_context>

<pallas_src>
import functools

import jax
import jax.numpy as jnp
from jax import lax
from jax.experimental import pallas as pl
from jax.experimental.pallas import tpu as pltpu


def _round_up(x, m):
    return (x + m - 1) // m * m


def _cdiv(a, b):
    return -(-a // b)


# ----------------------------------------------------------------------------
# Pallas kernel (G batch elements per grid step, concatenated on the lane axis)
# ----------------------------------------------------------------------------
def _make_unit_kernel(pool, W, cip, cop, lanes):
    """Fused Unit kernel.  Activations are (C, lanes), lanes = G * padded(H*W)."""

    def patches(act, mask):
        # act : (C, lanes) f32, mask : (9, lanes) f32 (0 where the 3x3 window leaves
        # the image or the lane sits in per-element / batch padding).
        # Roll wrap-around (across rows, element boundaries, padding) only ever hits
        # masked positions.  The center tap is all-ones inside the image, so its mask
        # multiply (and the (1,L)->(C,L) broadcast) is skipped; the garbage this
        # leaves in *padding* lanes never reaches a valid output lane.
        taps = []
        t = 0
        for dh in (-1, 0, 1):
            for dw in (-1, 0, 1):
                off = dh * W + dw
                if off == 0:
                    taps.append(act)
                else:
                    sh = pltpu.roll(act, shift=(-off) % lanes, axis=1)
                    taps.append(sh * mask[t:t + 1, :])
                t += 1
        # (9*C, lanes); cast once to bf16 for the MXU (f32 accumulation at the dot).
        return jnp.concatenate(taps, axis=0).astype(jnp.bfloat16)

    def body(xm, xs_b, mask, cvec, w2, w3x):
        s1 = cvec[0:cip, 0:1]
        t1 = cvec[0:cip, 1:2]
        s2 = cvec[0:cop, 2:3]
        t2 = cvec[0:cop, 3:4]
        bo = cvec[0:cop, 4:5]
        a = jnp.maximum(xm * s1 + t1, 0.0)                   # bn1 + relu1 (folded BN)
        y = jnp.dot(w2, patches(a, mask),                    # conv2 (bias folded in t2)
                    preferred_element_type=jnp.float32)
        h = jnp.maximum(y * s2 + t2, 0.0)                    # bn2 + relu2
        p3 = patches(h, mask)                                # (9*cop, lanes) bf16
        if xs_b is not None:                                 # fuse 1x1 stride-2 residual
            p3 = jnp.concatenate([p3, xs_b], axis=0)         #   into conv3's K dim
        return jnp.dot(w3x, p3, preferred_element_type=jnp.float32) + bo

    if pool:
        def kernel(xm_ref, xs_ref, mask_ref, cvec_ref, w2_ref, w3_ref, out_ref):
            out_ref[...] = body(xm_ref[...], xs_ref[...].astype(jnp.bfloat16),
                                mask_ref[...], cvec_ref[...], w2_ref[...], w3_ref[...])
    else:
        def kernel(xm_ref, mask_ref, cvec_ref, w2_ref, w3_ref, out_ref):
            xm = xm_ref[...]
            out_ref[...] = xm + body(xm, None, mask_ref[...], cvec_ref[...],
                                     w2_ref[...], w3_ref[...])  # identity residual
    return kernel


# ----------------------------------------------------------------------------
# Wrapper glue (pool / reshapes / pads / lane-major packing) and the pallas_call
# ----------------------------------------------------------------------------
def _maxpool_2x2_pad01_nchw(x):
    # nn.MaxPool2d((2,2), stride 2, padding=(0,1)): implicit -inf padding of 1 on W.
    xp = jnp.pad(x, ((0, 0), (0, 0), (0, 0), (1, 1)), constant_values=-jnp.inf)
    N, C, H, Wp = xp.shape
    Ho, Wo = H // 2, Wp // 2
    xr = xp[:, :, :2 * Ho, :2 * Wo].reshape(N, C, Ho, 2, Wo, 2)
    return xr.max(axis=(3, 5))


def _make_tap_masks(H, W, p_pad):
    """(9, p_pad) validity masks for the 9 taps of a 3x3 / pad-1 conv on an HxW grid."""
    h = jnp.arange(H, dtype=jnp.int32)[:, None]
    w = jnp.arange(W, dtype=jnp.int32)[None, :]
    rows = []
    for dh in (-1, 0, 1):
        for dw in (-1, 0, 1):
            ok = (h + dh >= 0) & (h + dh < H) & (w + dw >= 0) & (w + dw < W)
            rows.append(ok.reshape(H * W))
    m = jnp.stack(rows, axis=0).astype(jnp.float32)          # (9, H*W)
    return jnp.pad(m, ((0, 0), (0, p_pad - H * W)))          # zero masks in lane padding


def _choose_grouping(N, Pp, cip, cop):
    """Elements per grid step (G) and number of steps.  Keep >=2 steps when N>1 so
    the 'parallel' grid axis still uses both TensorCores on v7x; cap G*Pp so the
    per-step VMEM footprint stays well under every generation's scoped limit
    (v7x has only 64 MiB physical VMEM per TC)."""
    # rough bytes/lane: double-buffered xm/xs/mask/out + f32 intermediates + bf16 patches
    per_lane = 4 * (5 * cip + 4 * cop + 18) + 2 * (10 * cip + 9 * cop)
    budget = 16 * 1024 * 1024
    g_max = max(1, budget // (per_lane * Pp))
    g = 1 if N == 1 else min(_cdiv(N, 2), g_max)
    steps = _cdiv(N, g)
    return steps, g


def _unit_forward_impl(x_nchw, fparams, out_c, pool):
    x = x_nchw.astype(jnp.float32)
    N, Ci, H0, W0 = x.shape
    cop = fparams["w2m"].shape[0]                            # padded out channels (x8)
    cip = fparams["w2m"].shape[1] // 9                       # padded in  channels (x8)

    if pool:
        # TODO(synk): MaxPool2d((2,2), padding=(0,1)) and the stride-2 input taps of the
        # 1x1 residual conv remain tiny plain-JAX wrapper glue; everything else is fused.
        xm4 = _maxpool_2x2_pad01_nchw(x)                     # x = self.pool1(x)
        Ho, Wo = xm4.shape[2], xm4.shape[3]
        xm = xm4.reshape(N, Ci, Ho * Wo)
        xs = x[:, :, ::2, ::2].reshape(N, Ci, Ho * Wo)       # conv1 stride-2 input taps
    else:
        Ho, Wo = H0, W0
        xm = x.reshape(N, Ci, Ho * Wo)
        xs = None

    P = Ho * Wo
    Pp = _round_up(P, 128)                                   # lane-dense per-element span
    steps, G = _choose_grouping(N, Pp, cip, cop)
    Nb = steps * G
    lanes = G * Pp

    def to_lane_major(a):                                    # (N,Ci,P) -> (cip, Nb*Pp)
        a = jnp.pad(a, ((0, Nb - N), (0, cip - Ci), (0, Pp - P)))
        return jnp.transpose(a, (1, 0, 2)).reshape(cip, Nb * Pp)

    xm_l = to_lane_major(xm)
    masks = jnp.tile(_make_tap_masks(Ho, Wo, Pp), (1, G))    # (9, lanes), per-element tiled

    kernel = _make_unit_kernel(pool, Wo, cip, cop, lanes)

    def bspec(c):                                            # per-step lane window
        return pl.BlockSpec((c, lanes), lambda s: (0, s))

    def fullspec(shape):                                     # shared (broadcast) block
        nd = len(shape)
        return pl.BlockSpec(shape, lambda s: (0,) * nd)

    args = [xm_l]
    in_specs = [bspec(cip)]
    if pool:
        args.append(to_lane_major(xs))
        in_specs.append(bspec(cip))
    args += [masks, fparams["cvec"], fparams["w2m"], fparams["w3m"]]
    in_specs += [fullspec(masks.shape), fullspec(fparams["cvec"].shape),
                 fullspec(fparams["w2m"].shape), fullspec(fparams["w3m"].shape)]

    out = pl.pallas_call(
        kernel,
        out_shape=jax.ShapeDtypeStruct((cop, Nb * Pp), jnp.float32),
        grid=(steps,),
        in_specs=in_specs,
        out_specs=bspec(cop),
        compiler_params=pltpu.CompilerParams(
            dimension_semantics=("parallel",),               # shard steps across TCs (v7x)
            vmem_limit_bytes=32 * 1024 * 1024),
    )(*args)
    return out, (N, Ho, Wo, P, Pp, G, steps, cop)


@functools.partial(jax.jit, static_argnames=("out_c", "pool"))
def unit_forward_padded(x_nchw, fparams, out_c, pool=False):
    """Production entry point: returns the padded lane-dense (cop, Nb*Pp) output so
    downstream Units can consume it without a post-kernel slice/reshape HBM copy."""
    out, _ = _unit_forward_impl(x_nchw, fparams, out_c, pool)
    return out


@functools.partial(jax.jit, static_argnames=("out_c", "pool"))
def unit_forward(x_nchw, fparams, out_c, pool=False):
    """NCHW-in / NCHW-out wrapper (end-of-network / validation only)."""
    out, (N, Ho, Wo, P, Pp, G, steps, cop) = _unit_forward_impl(x_nchw, fparams, out_c, pool)
    out = out.reshape(cop, steps * G, Pp).transpose(1, 0, 2)
    return out[:N, :out_c, :P].reshape(N, out_c, Ho, Wo)


# ----------------------------------------------------------------------------
# Deterministic parameter construction, one-time folding, pure-JAX reference
# ----------------------------------------------------------------------------
def make_unit_params(key, in_c, out_c, pool):
    eps = 1e-5
    ks = jax.random.split(key, 16)

    def unif(k, shape, bound):
        return jax.random.uniform(k, shape, jnp.float32, -bound, bound)

    p = {}
    # conv2: 3x3 in_c->out_c, conv3: 3x3 out_c->out_c (weights generated in HWIO)
    p["w2"] = unif(ks[0], (3, 3, in_c, out_c), (9 * in_c) ** -0.5)
    p["b2"] = unif(ks[1], (out_c,), (9 * in_c) ** -0.5)
    p["w3"] = unif(ks[2], (3, 3, out_c, out_c), (9 * out_c) ** -0.5)
    p["b3"] = unif(ks[3], (out_c,), (9 * out_c) ** -0.5)

    # BN1(in_c), BN2(out_c): inference-mode running stats, folded to scale s / shift t
    def bn_fold(kg, kb, km, kv, c):
        g = 1.0 + 0.1 * jax.random.normal(kg, (c,), jnp.float32)
        b = 0.1 * jax.random.normal(kb, (c,), jnp.float32)
        m = 0.1 * jax.random.normal(km, (c,), jnp.float32)
        v = 0.5 + jnp.abs(jax.random.normal(kv, (c,), jnp.float32))
        s = g / jnp.sqrt(v + eps)
        return s, b - m * s

    p["s1"], p["t1"] = bn_fold(ks[4], ks[5], ks[6], ks[7], in_c)
    p["s2"], p["t2"] = bn_fold(ks[8], ks[9], ks[10], ks[11], out_c)

    if pool:
        # conv1: 1x1, stride 2, in_c -> out_c
        p["w1"] = unif(ks[12], (in_c, out_c), in_c ** -0.5)
        p["b1"] = unif(ks[13], (out_c,), in_c ** -0.5)
    return p


def fold_unit_params(p, in_c, out_c, pool):
    """One-time folding into kernel layout: channels padded to multiples of 8, 3x3
    weights flattened to im2col (Co, 9*Ci) and cast to bf16 (MXU operands), conv2 bias
    folded into the BN2 shift, 1x1 residual conv fused into conv3's weight/bias, and
    all per-channel vectors packed into one (cpmax, 8) f32 operand."""
    cip = _round_up(in_c, 8)
    cop = _round_up(out_c, 8)
    cpmax = max(cip, cop)

    def col(v, c):
        return jnp.pad(v, (0, cpmax - c))

    b_out = p["b3"] + (p["b1"] if pool else 0.0)             # conv1 bias folded into conv3's
    zeros = jnp.zeros((cpmax,), jnp.float32)
    cvec = jnp.stack([col(p["s1"], in_c), col(p["t1"], in_c),
                      col(p["s2"], out_c), col(p["t2"] + p["s2"] * p["b2"], out_c),
                      col(b_out, out_c), zeros, zeros, zeros], axis=1)   # (cpmax, 8)

    f = {"cvec": cvec}
    w2 = jnp.pad(p["w2"], ((0, 0), (0, 0), (0, cip - in_c), (0, cop - out_c)))
    f["w2m"] = w2.reshape(9 * cip, cop).T.astype(jnp.bfloat16)           # (cop, 9*cip)
    w3 = jnp.pad(p["w3"], ((0, 0), (0, 0), (0, cop - out_c), (0, cop - out_c)))
    w3m = w3.reshape(9 * cop, cop).T                                     # (cop, 9*cop)
    if pool:
        w1 = jnp.pad(p["w1"], ((0, cip - in_c), (0, cop - out_c)))       # (cip, cop)
        w3m = jnp.concatenate([w3m, w1.T], axis=1)                       # (cop, 9*cop+cip)
    f["w3m"] = w3m.astype(jnp.bfloat16)
    return f


def unit_reference(x_nchw, p, pool=False):
    """Pure-JAX f32 reference (same eval-mode BN folding), used to validate the kernel."""
    x = x_nchw.astype(jnp.float32)
    if pool:
        xm = jnp.transpose(_maxpool_2x2_pad01_nchw(x), (0, 2, 3, 1))
        xs = jnp.transpose(x[:, :, ::2, ::2], (0, 2, 3, 1))
        res = jnp.einsum("nhwc,cd->nhwd", xs, p["w1"]) + p["b1"]
    else:
        xm = jnp.transpose(x, (0, 2, 3, 1))
        res = xm
    a = jnp.maximum(xm * p["s1"] + p["t1"], 0.0)
    y = lax.conv_general_dilated(a, p["w2"], (1, 1), "SAME",
                                 dimension_numbers=("NHWC", "HWIO", "NHWC")) + p["b2"]
    h = jnp.maximum(y * p["s2"] + p["t2"], 0.0)
    z = lax.conv_general_dilated(h, p["w3"], (1, 1), "SAME",
                                 dimension_numbers=("NHWC", "HWIO", "NHWC")) + p["b3"]
    return jnp.transpose(res + z, (0, 3, 1, 2))


# ----------------------------------------------------------------------------
if __name__ == "__main__":
    key = jax.random.PRNGKey(0)
    kx1, kx2, kp1, kp2 = jax.random.split(key, 4)

    # Kernel uses bf16 MXU operands with f32 accumulation; tolerance vs the f32
    # reference is sized for that (~3e-3 observed-scale error, 2e-2 budgeted).
    TOL = dict(atol=2e-2, rtol=2e-2)

    # Case 1: pool=False (identity residual, in_c == out_c).  N=3 exercises batch
    # padding + lane-axis batching (2 grid steps x 2 elements per step).
    x1 = jax.random.normal(kx1, (3, 4, 16, 16), jnp.float32)
    p1 = make_unit_params(kp1, 4, 4, pool=False)
    f1 = fold_unit_params(p1, 4, 4, pool=False)
    y1 = jax.block_until_ready(unit_forward(x1, f1, out_c=4, pool=False))
    r1 = unit_reference(x1, p1, pool=False)
    assert y1.shape == (3, 4, 16, 16)
    assert jnp.allclose(y1, r1, **TOL), float(jnp.max(jnp.abs(y1 - r1)))

    # Case 2: pool=True (maxpool + fused stride-2 1x1 residual conv); H even / W odd
    # so both branches produce matching spatial dims, as the original module assumes.
    x2 = jax.random.normal(kx2, (4, 4, 16, 15), jnp.float32)
    p2 = make_unit_params(kp2, 4, 8, pool=True)
    f2 = fold_unit_params(p2, 4, 8, pool=True)
    y2 = jax.block_until_ready(unit_forward(x2, f2, out_c=8, pool=True))
    r2 = unit_reference(x2, p2, pool=True)
    assert y2.shape == (4, 8, 8, 8)
    assert jnp.allclose(y2, r2, **TOL), float(jnp.max(jnp.abs(y2 - r2)))

    print("KERNEL_OK")
</pallas_src>

<mosaic_0001>
module attributes {stable_mosaic.version = 11 : i64} {
  func.func @kernel(%arg0: i32, %arg1: memref<8x512xf32, #tpu.memory_space<vmem>>, %arg2: memref<9x512xf32, #tpu.memory_space<vmem>>, %arg3: memref<8x8xf32, #tpu.memory_space<vmem>>, %arg4: memref<8x72xbf16, #tpu.memory_space<vmem>>, %arg5: memref<8x72xbf16, #tpu.memory_space<vmem>>, %arg6: memref<8x512xf32, #tpu.memory_space<vmem>>) attributes {dimension_semantics = [#tpu.dimension_semantics<parallel>], iteration_bounds = array<i64: 2>, scalar_prefetch = 0 : i64, scratch_operands = 0 : i64, tpu.core_type = #tpu.core_type<tc>, window_params = [{transform_indices = @transform_0, window_bounds = array<i64: 8, 512>}, {pipeline_mode = #tpu.pipeline_mode<synchronous>, transform_indices = @transform_1, window_bounds = array<i64: 9, 512>}, {pipeline_mode = #tpu.pipeline_mode<synchronous>, transform_indices = @transform_2, window_bounds = array<i64: 8, 8>}, {pipeline_mode = #tpu.pipeline_mode<synchronous>, transform_indices = @transform_3, window_bounds = array<i64: 8, 72>}, {pipeline_mode = #tpu.pipeline_mode<synchronous>, transform_indices = @transform_4, window_bounds = array<i64: 8, 72>}, {transform_indices = @transform_5, window_bounds = array<i64: 8, 512>}]} {
    %c0 = arith.constant 0 : index
    %c0_0 = arith.constant 0 : index
    %0 = vector.load %arg1[%c0, %c0_0] : memref<8x512xf32, #tpu.memory_space<vmem>>, vector<8x512xf32>
    %c0_1 = arith.constant 0 : index
    %c0_2 = arith.constant 0 : index
    %1 = vector.load %arg2[%c0_1, %c0_2] : memref<9x512xf32, #tpu.memory_space<vmem>>, vector<9x512xf32>
    %c0_3 = arith.constant 0 : index
    %c0_4 = arith.constant 0 : index
    %2 = vector.load %arg3[%c0_3, %c0_4] : memref<8x8xf32, #tpu.memory_space<vmem>>, vector<8x8xf32>
    %c0_5 = arith.constant 0 : index
    %c0_6 = arith.constant 0 : index
    %3 = vector.load %arg4[%c0_5, %c0_6] : memref<8x72xbf16, #tpu.memory_space<vmem>>, vector<8x72xbf16>
    %c0_7 = arith.constant 0 : index
    %c0_8 = arith.constant 0 : index
    %4 = vector.load %arg5[%c0_7, %c0_8] : memref<8x72xbf16, #tpu.memory_space<vmem>>, vector<8x72xbf16>
    %5 = vector.extract_strided_slice %2 {offsets = [0, 0], sizes = [8, 1], strides = [1, 1]} : vector<8x8xf32> to vector<8x1xf32>
    %6 = vector.extract_strided_slice %2 {offsets = [0, 1], sizes = [8, 1], strides = [1, 1]} : vector<8x8xf32> to vector<8x1xf32>
    %7 = vector.extract_strided_slice %2 {offsets = [0, 2], sizes = [8, 1], strides = [1, 1]} : vector<8x8xf32> to vector<8x1xf32>
    %8 = vector.extract_strided_slice %2 {offsets = [0, 3], sizes = [8, 1], strides = [1, 1]} : vector<8x8xf32> to vector<8x1xf32>
    %9 = vector.extract_strided_slice %2 {offsets = [0, 4], sizes = [8, 1], strides = [1, 1]} : vector<8x8xf32> to vector<8x1xf32>
    %10 = vector.broadcast %5 : vector<8x1xf32> to vector<8x512xf32>
    %11 = arith.mulf %0, %10 : vector<8x512xf32>
    %12 = vector.broadcast %6 : vector<8x1xf32> to vector<8x512xf32>
    %13 = arith.addf %11, %12 : vector<8x512xf32>
    %cst = arith.constant 0.000000e+00 : f32
    %14 = vector.broadcast %cst : f32 to vector<8x512xf32>
    %15 = arith.maximumf %13, %14 : vector<8x512xf32>
    %c17_i32 = arith.constant 17 : i32
    %16 = tpu.dynamic_rotate %15 by %c17_i32 dim 1 : vector<8x512xf32>, i32 -> vector<8x512xf32>
    %17 = vector.extract_strided_slice %1 {offsets = [0, 0], sizes = [1, 512], strides = [1, 1]} : vector<9x512xf32> to vector<1x512xf32>
    %18 = vector.broadcast %17 : vector<1x512xf32> to vector<8x512xf32>
    %19 = arith.mulf %16, %18 : vector<8x512xf32>
    %c16_i32 = arith.constant 16 : i32
    %20 = tpu.dynamic_rotate %15 by %c16_i32 dim 1 : vector<8x512xf32>, i32 -> vector<8x512xf32>
    %21 = vector.extract_strided_slice %1 {offsets = [1, 0], sizes = [1, 512], strides = [1, 1]} : vector<9x512xf32> to vector<1x512xf32>
    %22 = vector.broadcast %21 : vector<1x512xf32> to vector<8x512xf32>
    %23 = arith.mulf %20, %22 : vector<8x512xf32>
    %c15_i32 = arith.constant 15 : i32
    %24 = tpu.dynamic_rotate %15 by %c15_i32 dim 1 : vector<8x512xf32>, i32 -> vector<8x512xf32>
    %25 = vector.extract_strided_slice %1 {offsets = [2, 0], sizes = [1, 512], strides = [1, 1]} : vector<9x512xf32> to vector<1x512xf32>
    %26 = vector.broadcast %25 : vector<1x512xf32> to vector<8x512xf32>
    %27 = arith.mulf %24, %26 : vector<8x512xf32>
    %c1_i32 = arith.constant 1 : i32
    %28 = tpu.dynamic_rotate %15 by %c1_i32 dim 1 : vector<8x512xf32>, i32 -> vector<8x512xf32>
    %29 = vector.extract_strided_slice %1 {offsets = [3, 0], sizes = [1, 512], strides = [1, 1]} : vector<9x512xf32> to vector<1x512xf32>
    %30 = vector.broadcast %29 : vector<1x512xf32> to vector<8x512xf32>
    %31 = arith.mulf %28, %30 : vector<8x512xf32>
    %c511_i32 = arith.constant 511 : i32
    %32 = tpu.dynamic_rotate %15 by %c511_i32 dim 1 : vector<8x512xf32>, i32 -> vector<8x512xf32>
    %33 = vector.extract_strided_slice %1 {offsets = [5, 0], sizes = [1, 512], strides = [1, 1]} : vector<9x512xf32> to vector<1x512xf32>
    %34 = vector.broadcast %33 : vector<1x512xf32> to vector<8x512xf32>
    %35 = arith.mulf %32, %34 : vector<8x512xf32>
    %c497_i32 = arith.constant 497 : i32
    %36 = tpu.dynamic_rotate %15 by %c497_i32 dim 1 : vector<8x512xf32>, i32 -> vector<8x512xf32>
    %37 = vector.extract_strided_slice %1 {offsets = [6, 0], sizes = [1, 512], strides = [1, 1]} : vector<9x512xf32> to vector<1x512xf32>
    %38 = vector.broadcast %37 : vector<1x512xf32> to vector<8x512xf32>
    %39 = arith.mulf %36, %38 : vector<8x512xf32>
    %c496_i32 = arith.constant 496 : i32
    %40 = tpu.dynamic_rotate %15 by %c496_i32 dim 1 : vector<8x512xf32>, i32 -> vector<8x512xf32>
    %41 = vector.extract_strided_slice %1 {offsets = [7, 0], sizes = [1, 512], strides = [1, 1]} : vector<9x512xf32> to vector<1x512xf32>
    %42 = vector.broadcast %41 : vector<1x512xf32> to vector<8x512xf32>
    %43 = arith.mulf %40, %42 : vector<8x512xf32>
    %c495_i32 = arith.constant 495 : i32
    %44 = tpu.dynamic_rotate %15 by %c495_i32 dim 1 : vector<8x512xf32>, i32 -> vector<8x512xf32>
    %45 = vector.extract_strided_slice %1 {offsets = [8, 0], sizes = [1, 512], strides = [1, 1]} : vector<9x512xf32> to vector<1x512xf32>
    %46 = vector.broadcast %45 : vector<1x512xf32> to vector<8x512xf32>
    %47 = arith.mulf %44, %46 : vector<8x512xf32>
    %48 = tpu.concatenate %19, %23, %27, %31, %15, %35, %39, %43, %47 in 0 : vector<8x512xf32>, vector<8x512xf32>, vector<8x512xf32>, vector<8x512xf32>, vector<8x512xf32>, vector<8x512xf32>, vector<8x512xf32>, vector<8x512xf32>, vector<8x512xf32> -> vector<72x512xf32>
    %49 = arith.truncf %48 : vector<72x512xf32> to vector<72x512xbf16>
    %cst_9 = arith.constant dense<0.000000e+00> : vector<8x512xf32>
    %50 = tpu.matmul %3, %49, %cst_9 {dimension_numbers = #tpu.dot_dimension_numbers<[1], [0], [0], [1], [0, 0, 1, 1], [], []>} : vector<8x72xbf16>, vector<72x512xbf16>, vector<8x512xf32> -> vector<8x512xf32>
    %51 = vector.broadcast %7 : vector<8x1xf32> to vector<8x512xf32>
    %52 = arith.mulf %50, %51 : vector<8x512xf32>
    %53 = vector.broadcast %8 : vector<8x1xf32> to vector<8x512xf32>
    %54 = arith.addf %52, %53 : vector<8x512xf32>
    %cst_10 = arith.constant 0.000000e+00 : f32
    %55 = vector.broadcast %cst_10 : f32 to vector<8x512xf32>
    %56 = arith.maximumf %54, %55 : vector<8x512xf32>
    %c17_i32_11 = arith.constant 17 : i32
    %57 = tpu.dynamic_rotate %56 by %c17_i32_11 dim 1 : vector<8x512xf32>, i32 -> vector<8x512xf32>
    %58 = vector.extract_strided_slice %1 {offsets = [0, 0], sizes = [1, 512], strides = [1, 1]} : vector<9x512xf32> to vector<1x512xf32>
    %59 = vector.broadcast %58 : vector<1x512xf32> to vector<8x512xf32>
    %60 = arith.mulf %57, %59 : vector<8x512xf32>
    %c16_i32_12 = arith.constant 16 : i32
    %61 = tpu.dynamic_rotate %56 by %c16_i32_12 dim 1 : vector<8x512xf32>, i32 -> vector<8x512xf32>
    %62 = vector.extract_strided_slice %1 {offsets = [1, 0], sizes = [1, 512], strides = [1, 1]} : vector<9x512xf32> to vector<1x512xf32>
    %63 = vector.broadcast %62 : vector<1x512xf32> to vector<8x512xf32>
    %64 = arith.mulf %61, %63 : vector<8x512xf32>
    %c15_i32_13 = arith.constant 15 : i32
    %65 = tpu.dynamic_rotate %56 by %c15_i32_13 dim 1 : vector<8x512xf32>, i32 -> vector<8x512xf32>
    %66 = vector.extract_strided_slice %1 {offsets = [2, 0], sizes = [1, 512], strides = [1, 1]} : vector<9x512xf32> to vector<1x512xf32>
    %67 = vector.broadcast %66 : vector<1x512xf32> to vector<8x512xf32>
    %68 = arith.mulf %65, %67 : vector<8x512xf32>
    %c1_i32_14 = arith.constant 1 : i32
    %69 = tpu.dynamic_rotate %56 by %c1_i32_14 dim 1 : vector<8x512xf32>, i32 -> vector<8x512xf32>
    %70 = vector.extract_strided_slice %1 {offsets = [3, 0], sizes = [1, 512], strides = [1, 1]} : vector<9x512xf32> to vector<1x512xf32>
    %71 = vector.broadcast %70 : vector<1x512xf32> to vector<8x512xf32>
    %72 = arith.mulf %69, %71 : vector<8x512xf32>
    %c511_i32_15 = arith.constant 511 : i32
    %73 = tpu.dynamic_rotate %56 by %c511_i32_15 dim 1 : vector<8x512xf32>, i32 -> vector<8x512xf32>
    %74 = vector.extract_strided_slice %1 {offsets = [5, 0], sizes = [1, 512], strides = [1, 1]} : vector<9x512xf32> to vector<1x512xf32>
    %75 = vector.broadcast %74 : vector<1x512xf32> to vector<8x512xf32>
    %76 = arith.mulf %73, %75 : vector<8x512xf32>
    %c497_i32_16 = arith.constant 497 : i32
    %77 = tpu.dynamic_rotate %56 by %c497_i32_16 dim 1 : vector<8x512xf32>, i32 -> vector<8x512xf32>
    %78 = vector.extract_strided_slice %1 {offsets = [6, 0], sizes = [1, 512], strides = [1, 1]} : vector<9x512xf32> to vector<1x512xf32>
    %79 = vector.broadcast %78 : vector<1x512xf32> to vector<8x512xf32>
    %80 = arith.mulf %77, %79 : vector<8x512xf32>
    %c496_i32_17 = arith.constant 496 : i32
    %81 = tpu.dynamic_rotate %56 by %c496_i32_17 dim 1 : vector<8x512xf32>, i32 -> vector<8x512xf32>
    %82 = vector.extract_strided_slice %1 {offsets = [7, 0], sizes = [1, 512], strides = [1, 1]} : vector<9x512xf32> to vector<1x512xf32>
    %83 = vector.broadcast %82 : vector<1x512xf32> to vector<8x512xf32>
    %84 = arith.mulf %81, %83 : vector<8x512xf32>
    %c495_i32_18 = arith.constant 495 : i32
    %85 = tpu.dynamic_rotate %56 by %c495_i32_18 dim 1 : vector<8x512xf32>, i32 -> vector<8x512xf32>
    %86 = vector.extract_strided_slice %1 {offsets = [8, 0], sizes = [1, 512], strides = [1, 1]} : vector<9x512xf32> to vector<1x512xf32>
    %87 = vector.broadcast %86 : vector<1x512xf32> to vector<8x512xf32>
    %88 = arith.mulf %85, %87 : vector<8x512xf32>
    %89 = tpu.concatenate %60, %64, %68, %72, %56, %76, %80, %84, %88 in 0 : vector<8x512xf32>, vector<8x512xf32>, vector<8x512xf32>, vector<8x512xf32>, vector<8x512xf32>, vector<8x512xf32>, vector<8x512xf32>, vector<8x512xf32>, vector<8x512xf32> -> vector<72x512xf32>
    %90 = arith.truncf %89 : vector<72x512xf32> to vector<72x512xbf16>
    %cst_19 = arith.constant dense<0.000000e+00> : vector<8x512xf32>
    %91 = tpu.matmul %4, %90, %cst_19 {dimension_numbers = #tpu.dot_dimension_numbers<[1], [0], [0], [1], [0, 0, 1, 1], [], []>} : vector<8x72xbf16>, vector<72x512xbf16>, vector<8x512xf32> -> vector<8x512xf32>
    %92 = vector.broadcast %9 : vector<8x1xf32> to vector<8x512xf32>
    %93 = arith.addf %91, %92 : vector<8x512xf32>
    %94 = arith.addf %0, %93 : vector<8x512xf32>
    %c0_20 = arith.constant 0 : index
    %c0_21 = arith.constant 0 : index
    %95 = vector.load %arg6[%c0_20, %c0_21] : memref<8x512xf32, #tpu.memory_space<vmem>>, vector<8x512xf32>
    tpu.vector_store %arg6[%c0_20, %c0_21], %94 {strides = array<i32>} : memref<8x512xf32, #tpu.memory_space<vmem>>, vector<8x512xf32>,
    return
  }
  func.func @transform_0(%arg0: i32) -> (i32, i32) {
    %c0_i32 = arith.constant 0 : i32
    %c0_i32_0 = arith.constant 0 : i32
    return %c0_i32, %arg0 : i32, i32
  }
  func.func @transform_1(%arg0: i32) -> (i32, i32) {
    %c0_i32 = arith.constant 0 : i32
    %c0_i32_0 = arith.constant 0 : i32
    %c0_i32_1 = arith.constant 0 : i32
    return %c0_i32, %c0_i32_0 : i32, i32
  }
  func.func @transform_2(%arg0: i32) -> (i32, i32) {
    %c0_i32 = arith.constant 0 : i32
    %c0_i32_0 = arith.constant 0 : i32
    %c0_i32_1 = arith.constant 0 : i32
    return %c0_i32, %c0_i32_0 : i32, i32
  }
  func.func @transform_3(%arg0: i32) -> (i32, i32) {
    %c0_i32 = arith.constant 0 : i32
    %c0_i32_0 = arith.constant 0 : i32
    %c0_i32_1 = arith.constant 0 : i32
    return %c0_i32, %c0_i32_0 : i32, i32
  }
  func.func @transform_4(%arg0: i32) -> (i32, i32) {
    %c0_i32 = arith.constant 0 : i32
    %c0_i32_0 = arith.constant 0 : i32
    %c0_i32_1 = arith.constant 0 : i32
    return %c0_i32, %c0_i32_0 : i32, i32
  }
  func.func @transform_5(%arg0: i32) -> (i32, i32) {
    %c0_i32 = arith.constant 0 : i32
    %c0_i32_0 = arith.constant 0 : i32
    return %c0_i32, %arg0 : i32, i32
  }
}

</mosaic_0001>

<llo_original>
// kernel: unit_forward.1
$region0: #{unit_forward.1}
  #allocation0 [shape = 'u32[]', space=smem, size = 0x4, offset = 0x4, fixed_abs, tag = 'smem constant byte address 0x4 - core index']
  #allocation1 [shape = 'u32[72,128]{1,0:T(1,128)}', space=vmem, size = 0x9000, scoped, tag = 'internal scratch']
  %s0 = inlined_call_operand.vmem [shape: f32[8,1024], index: 0, kind: input, shape index: {}]
  %s1 = inlined_call_operand.vmem [shape: f32[9,512], index: 1, kind: input, shape index: {}]
  %s2 = inlined_call_operand.vmem [shape: f32[8,8], index: 2, kind: input, shape index: {}]
  %s3 = inlined_call_operand.vmem [shape: bf16[8,72], index: 3, kind: input, shape index: {}]
  %s4 = inlined_call_operand.vmem [shape: bf16[8,72], index: 4, kind: input, shape index: {}]
  %s5 = inlined_call_operand.vmem [shape: f32[8,1024], index: 5, kind: output, shape index: {}]
  %s6 = sld [smem:[#allocation0]]
  $region53: #{unit_forward.1} parent=0
    _
  %s8 = ssub.s32 1, %s6
  %s9 = scalar_select 0, %s8, %s6
  loop: start=0, step=1, limit=4
  $region2: #{unit_forward.1} parent=0 // loop_pre_header
    _
  $region3: #{unit_forward.1} parent=0 // loop_header
    %s11 = sphi 0, %s15
    %p12 = scmp.ge.s32.totalorder %s11, 4
    %s21 = sphi 0, %s23
    %s24 = sphi 0, %s21
    %s25 = sphi 0, %s24
    %s41 = sphi 0, %s25
    %s45 = sphi 0, %s45
    %s47 = sphi 0, %s45
    %s48 = sphi 0, %s47
    %s62 = sphi 0, %s48
    %s66 = sphi 0, %s66
    %s68 = sphi 0, %s66
    %s69 = sphi 0, %s68
    %s83 = sphi 0, %s69
    %s87 = sphi 0, %s87
    %s89 = sphi 0, %s87
    %s90 = sphi 0, %s89
    %s104 = sphi 0, %s90
    %s108 = sphi 0, %s108
    %s110 = sphi 0, %s108
    %s111 = sphi 0, %s110
    %s125 = sphi 0, %s111
    %s131 = sphi 0, %s133
    %s134 = sphi 0, %s131
    %s135 = sphi 0, %s134
    %s151 = sphi 0, %s135
  $region4: #{unit_forward.1} parent=0 // loop_header_branch
    %14 = sbr.rel (%p12) target = $region8
  $region5: #{unit_forward.1} parent=0 // loop_body
    %s16 = ssub.s32 %s11, 1
    %s17 = ssub.s32 %s11, 2
    %s18 = sadd.s32 %s11, 1
    %s19 = ssub.s32 %s11, %s18
    %p20 = scmp.eq.s32.totalorder %s19, 0
    %s22 = sadd.s32 %s21, 1
    %s23 = scalar_select %p20, %s21, %s22
    %p26 = pneg %p20
    %p27 = scmp.eq.s32.totalorder %s11, 1
    %p28 = por %p26, %p27
    %p29 = scmp.ne.s32.totalorder %s21, %s24
    %p30 = scmp.eq.s32.totalorder %s11, 0
    %p31 = por %p29, %p30
    %p32 = scmp.ne.s32.totalorder %s21, %s24
    %p33 = scmp.eq.s32.totalorder %s16, 1
    %p34 = por %p32, %p33
    %p35 = scmp.ne.s32.totalorder %s24, %s25
    %p36 = scmp.eq.s32.totalorder %s16, 0
    %p37 = por %p35, %p36
    %p38 = scmp.ne.s32.totalorder %s24, %s25
    %p39 = scmp.eq.s32.totalorder %s17, 1
    %p40 = por %p38, %p39
    %p42 = scmp.ne.s32.totalorder %s25, %s41
    %p43 = scmp.eq.s32.totalorder %s17, 0
    %p44 = por %p42, %p43
    %s46 = sadd.s32 %s45, 1
    %p49 = scmp.eq.s32.totalorder %s11, 1
    %p50 = scmp.ne.s32.totalorder %s45, %s47
    %p51 = scmp.eq.s32.totalorder %s11, 0
    %p52 = por %p50, %p51
    %p53 = scmp.ne.s32.totalorder %s45, %s47
    %p54 = scmp.eq.s32.totalorder %s16, 1
    %p55 = por %p53, %p54
    %p56 = scmp.ne.s32.totalorder %s47, %s48
    %p57 = scmp.eq.s32.totalorder %s16, 0
    %p58 = por %p56, %p57
    %p59 = scmp.ne.s32.totalorder %s47, %s48
    %p60 = scmp.eq.s32.totalorder %s17, 1
    %p61 = por %p59, %p60
    %p63 = scmp.ne.s32.totalorder %s48, %s62
    %p64 = scmp.eq.s32.totalorder %s17, 0
    %p65 = por %p63, %p64
    %s67 = sadd.s32 %s66, 1
    %p70 = scmp.eq.s32.totalorder %s11, 1
    %p71 = scmp.ne.s32.totalorder %s66, %s68
    %p72 = scmp.eq.s32.totalorder %s11, 0
    %p73 = por %p71, %p72
    %p74 = scmp.ne.s32.totalorder %s66, %s68
    %p75 = scmp.eq.s32.totalorder %s16, 1
    %p76 = por %p74, %p75
    %p77 = scmp.ne.s32.totalorder %s68, %s69
    %p78 = scmp.eq.s32.totalorder %s16, 0
    %p79 = por %p77, %p78
    %p80 = scmp.ne.s32.totalorder %s68, %s69
    %p81 = scmp.eq.s32.totalorder %s17, 1
    %p82 = por %p80, %p81
    %p84 = scmp.ne.s32.totalorder %s69, %s83
    %p85 = scmp.eq.s32.totalorder %s17, 0
    %p86 = por %p84, %p85
    %s88 = sadd.s32 %s87, 1
    %p91 = scmp.eq.s32.totalorder %s11, 1
    %p92 = scmp.ne.s32.totalorder %s87, %s89
    %p93 = scmp.eq.s32.totalorder %s11, 0
    %p94 = por %p92, %p93
    %p95 = scmp.ne.s32.totalorder %s87, %s89
    %p96 = scmp.eq.s32.totalorder %s16, 1
    %p97 = por %p95, %p96
    %p98 = scmp.ne.s32.totalorder %s89, %s90
    %p99 = scmp.eq.s32.totalorder %s16, 0
    %p100 = por %p98, %p99
    %p101 = scmp.ne.s32.totalorder %s89, %s90
    %p102 = scmp.eq.s32.totalorder %s17, 1
    %p103 = por %p101, %p102
    %p105 = scmp.ne.s32.totalorder %s90, %s104
    %p106 = scmp.eq.s32.totalorder %s17, 0
    %p107 = por %p105, %p106
    %s109 = sadd.s32 %s108, 1
    %p112 = scmp.eq.s32.totalorder %s11, 1
    %p113 = scmp.ne.s32.totalorder %s108, %s110
    %p114 = scmp.eq.s32.totalorder %s11, 0
    %p115 = por %p113, %p114
    %p116 = scmp.ne.s32.totalorder %s108, %s110
    %p117 = scmp.eq.s32.totalorder %s16, 1
    %p118 = por %p116, %p117
    %p119 = scmp.ne.s32.totalorder %s110, %s111
    %p120 = scmp.eq.s32.totalorder %s16, 0
    %p121 = por %p119, %p120
    %p122 = scmp.ne.s32.totalorder %s110, %s111
    %p123 = scmp.eq.s32.totalorder %s17, 1
    %p124 = por %p122, %p123
    %p126 = scmp.ne.s32.totalorder %s111, %s125
    %p127 = scmp.eq.s32.totalorder %s17, 0
    %p128 = por %p126, %p127
    %s129 = ssub.s32 %s11, %s18
    %p130 = scmp.eq.s32.totalorder %s129, 0
    %s132 = sadd.s32 %s131, 1
    %s133 = scalar_select %p130, %s131, %s132
    %p136 = pneg %p130
    %p137 = scmp.eq.s32.totalorder %s11, 1
    %p138 = por %p136, %p137
    %p139 = scmp.ne.s32.totalorder %s131, %s134
    %p140 = scmp.eq.s32.totalorder %s11, 0
    %p141 = por %p139, %p140
    %p142 = scmp.ne.s32.totalorder %s131, %s134
    %p143 = scmp.eq.s32.totalorder %s16, 1
    %p144 = por %p142, %p143
    %p145 = scmp.ne.s32.totalorder %s134, %s135
    %p146 = scmp.eq.s32.totalorder %s16, 0
    %p147 = por %p145, %p146
    %p148 = scmp.ne.s32.totalorder %s134, %s135
    %p149 = scmp.eq.s32.totalorder %s17, 1
    %p150 = por %p148, %p149
    %p152 = scmp.ne.s32.totalorder %s135, %s151
    %p153 = scmp.eq.s32.totalorder %s17, 0
    %p154 = por %p152, %p153
    %p155 = scmp.le.s32.totalorder 1, %s11
    %p156 = scmp.lt.s32.totalorder %s11, 3
    %p157 = pnand %p155, %p156
    %p158 = pneg %p157
    // Predicated region
    $region9: #{unit_forward.1} parent=5 // pred_check
      _
    $region10: #{unit_forward.1} parent=5 // pred_check_branch
      %160 = sbr.rel (%p157) target = $region12
    $region11: #{unit_forward.1} parent=5 // pred_region
      %s161 = ssub.s32 %s11, 1
      // Predicated region
      $region13: #{unit_forward.1} parent=11 // pred_check
        %p162 = pneg %p58
      $region14: #{unit_forward.1} parent=11 // pred_check_branch
        %164 = sbr.rel (%p162) target = $region16
      $region15: #{unit_forward.1} parent=11 // pred_region
        _
      $region16: #{unit_forward.1} parent=11 // pred_fallthru
        _
      // Predicated region
      $region17: #{unit_forward.1} parent=11 // pred_check
        %p165 = pneg %p79
      $region18: #{unit_forward.1} parent=11 // pred_check_branch
        %167 = sbr.rel (%p165) target = $region20
      $region19: #{unit_forward.1} parent=11 // pred_region
        _
      $region20: #{unit_forward.1} parent=11 // pred_fallthru
        _
      // Predicated region
      $region21: #{unit_forward.1} parent=11 // pred_check
        %p168 = pneg %p100
      $region22: #{unit_forward.1} parent=11 // pred_check_branch
        %170 = sbr.rel (%p168) target = $region24
      $region23: #{unit_forward.1} parent=11 // pred_region
        _
      $region24: #{unit_forward.1} parent=11 // pred_fallthru
        _
      // Predicated region
      $region25: #{unit_forward.1} parent=11 // pred_check
        %p171 = pneg %p121
      $region26: #{unit_forward.1} parent=11 // pred_check_branch
        %173 = sbr.rel (%p171) target = $region28
      $region27: #{unit_forward.1} parent=11 // pred_region
        _
      $region28: #{unit_forward.1} parent=11 // pred_fallthru
        _
    $region12: #{unit_forward.1} parent=5 // pred_fallthru
      _
    %p174 = scmp.lt.s32.totalorder %s11, 2
    // Predicated region
    $region29: #{unit_forward.1} parent=5 // pred_check
      %p175 = pneg %p174
    $region30: #{unit_forward.1} parent=5 // pred_check_branch
      %177 = sbr.rel (%p175) target = $region32
    $region31: #{unit_forward.1} parent=5 // pred_region
      // Predicated region
      $region33: #{unit_forward.1} parent=31 // pred_check
        %p178 = pneg %p31
      $region34: #{unit_forward.1} parent=31 // pred_check_branch
        %180 = sbr.rel (%p178) target = $region36
      $region35: #{unit_forward.1} parent=31 // pred_region
        %s181 = smul.u32 4, %s11
        %p182 = scmp.lt.s32.totalorder %s181, 7
        %s183 = scalar_select %p182, %s181, 7
        %s184 = smul.addr %s183, 8
        %s185 = scalar_lea.vmem %s0, %s184
        %s186 = smul.u32 4, %s11
      $region36: #{unit_forward.1} parent=31 // pred_fallthru
        _
    $region32: #{unit_forward.1} parent=5 // pred_fallthru
      _
    %p187 = scmp.le.s32.totalorder 1, %s11
    %p188 = scmp.lt.s32.totalorder %s11, 3
    %p189 = pnand %p187, %p188
    %p190 = pneg %p189
    // Predicated region
    $region37: #{unit_forward.1} parent=5 // pred_check
      _
    $region38: #{unit_forward.1} parent=5 // pred_check_branch
      %192 = sbr.rel (%p189) target = $region40
    $region39: #{unit_forward.1} parent=5 // pred_region
      %s193 = ssub.s32 %s11, 1
      %s194 = smul.u32 4, %s16
      %p195 = scmp.lt.s32.totalorder %s194, 7
      %s196 = scalar_select %p195, %s194, 7
      %s197 = smul.addr %s196, 8
      %s198 = scalar_lea.vmem %s0, %s197
      %p199 = pneg %p37
      %p200 = pneg %p34
      %p201 = pneg %p58
      %p202 = pneg %p55
      %p203 = pneg %p79
      %p204 = pneg %p76
      %p205 = pneg %p100
      %p206 = pneg %p97
      %p207 = pneg %p121
      %p208 = pneg %p118
      %p209 = pneg %p147
      %p210 = pneg %p144
      %s211 = smul.u32 4, %s16
      %p212 = scmp.lt.s32.totalorder %s211, 7
      %s213 = scalar_select %p212, %s211, 7
      %s214 = smul.addr %s213, 8
      %s215 = scalar_lea.vmem %s5, %s214
      %s216 = smul.u32 4, %s16
      %p217 = scmp.lt.s32.totalorder %s216, 7
      %s218 = scalar_select %p217, %s216, 7
      %s219 = smul.addr %s218, 8
      %s220 = scalar_lea.vmem %s0, %s219
      %s221 = smul.u32 4, %s16
      %s222 = smul.u32 4, %s16
      %p223 = scmp.lt.s32.totalorder %s222, 7
      %s224 = scalar_select %p223, %s222, 7
      %s225 = smul.addr %s224, 8
      %s226 = scalar_lea.vmem %s5, %s225
      %s227 = smul.u32 4, %s16
      %v229 = vld [vmem:[%s220] sm:$0xff]
      %v230 = vld [vmem:[%s220 + $0x8] sm:$0xff]
      %v231 = vld [vmem:[%s220 + $0x10] sm:$0xff]
      %v232 = vld [vmem:[%s220 + $0x18] sm:$0xff]
      %v233 = vld [vmem:[%s1] sm:$0xff]
      %v234 = vld [vmem:[%s1 + $0x8] sm:$0xff]
      %v235 = vld [vmem:[%s1 + $0x10] sm:$0xff]
      %v236 = vld [vmem:[%s1 + $0x18] sm:$0xff]
      %v237 = vld [vmem:[%s1 + $0x20] sm:$0x1]
      %v238 = vld [vmem:[%s1 + $0x28] sm:$0x1]
      %v239 = vld [vmem:[%s1 + $0x30] sm:$0x1]
      %v240 = vld [vmem:[%s1 + $0x38] sm:$0x1]
      %v241 = vld [vmem:[%s2] sm:$0xff]
      %v242 = vld [vmem:[%s3] sm:$0xf]
      %v243 = vld [vmem:[%s4] sm:$0xf]
      %245 = vset.pattern.permute.xlu0 0
      %246 = vperm.xlu0 %245, %v241
      %v247 = vpop.permute.xlu0 %246
      %v249 = vmul.f32 %v229, %v247
      %v250 = vmul.f32 %v230, %v247
      %v251 = vmul.f32 %v231, %v247
      %v252 = vmul.f32 %v232, %v247
      %253 = vset.pattern.permute.xlu0 1
      %254 = vperm.xlu0 %253, %v241
      %v255 = vpop.permute.xlu0 %254
      %v257 = vadd.f32 %v249, %v255
      %v258 = vadd.f32 %v250, %v255
      %v259 = vadd.f32 %v251, %v255
      %v260 = vadd.f32 %v252, %v255
      %v261 = vmax.f32 %v257, 0.0
      %v262 = vmax.f32 %v258, 0.0
      %v263 = vmax.f32 %v259, 0.0
      %v264 = vmax.f32 %v260, 0.0
      %265 = vrot.lane.b32.xlu0 %v261, 17
      %v266 = vpop.permute.xlu0 %265
      %267 = vrot.lane.b32.xlu0 %v262, 17
      %v268 = vpop.permute.xlu0 %267
      %269 = vrot.lane.b32.xlu0 %v263, 17
      %v270 = vpop.permute.xlu0 %269
      %271 = vrot.lane.b32.xlu0 %v264, 17
      %v272 = vpop.permute.xlu0 %271
      %v273 = vlaneseq
      %v274 = vand.u32 %v273, 127
      %vm275 = vcmp.lt.s32.totalorder %v274, 17
      %v276 = vsel %vm275, %v270, %v272
      %v277 = vsel %vm275, %v268, %v270
      %v278 = vsel %vm275, %v266, %v268
      %v279 = vsel %vm275, %v272, %v266
      %v280 = vperm.slane %v233, 0
      %v281 = vperm.slane %v234, 0
      %v282 = vperm.slane %v235, 0
      %v283 = vperm.slane %v236, 0
      %v284 = vmul.f32 %v279, %v280
      %v285 = vmul.f32 %v278, %v281
      %v286 = vmul.f32 %v277, %v282
      %v287 = vmul.f32 %v276, %v283
      %288 = vrot.lane.b32.xlu0 %v261, 16
      %v289 = vpop.permute.xlu0 %288
      %290 = vrot.lane.b32.xlu0 %v262, 16
      %v291 = vpop.permute.xlu0 %290
      %292 = vrot.lane.b32.xlu0 %v263, 16
      %v293 = vpop.permute.xlu0 %292
      %294 = vrot.lane.b32.xlu0 %v264, 16
      %v295 = vpop.permute.xlu0 %294
      %vm296 = vcmp.lt.s32.totalorder %v274, 16
      %v297 = vsel %vm296, %v293, %v295
      %v298 = vsel %vm296, %v291, %v293
      %v299 = vsel %vm296, %v289, %v291
      %v300 = vsel %vm296, %v295, %v289
      %v301 = vperm.slane %v233, 1
      %v302 = vperm.slane %v234, 1
      %v303 = vperm.slane %v235, 1
      %v304 = vperm.slane %v236, 1
      %v305 = vmul.f32 %v300, %v301
      %v306 = vmul.f32 %v299, %v302
      %v307 = vmul.f32 %v298, %v303
      %v308 = vmul.f32 %v297, %v304
      %309 = vrot.lane.b32.xlu0 %v261, 15
      %v310 = vpop.permute.xlu0 %309
      %311 = vrot.lane.b32.xlu0 %v262, 15
      %v312 = vpop.permute.xlu0 %311
      %313 = vrot.lane.b32.xlu0 %v263, 15
      %v314 = vpop.permute.xlu0 %313
      %315 = vrot.lane.b32.xlu0 %v264, 15
      %v316 = vpop.permute.xlu0 %315
      %vm317 = vcmp.lt.s32.totalorder %v274, 15
      %v318 = vsel %vm317, %v314, %v316
      %v319 = vsel %vm317, %v312, %v314
      %v320 = vsel %vm317, %v310, %v312
      %v321 = vsel %vm317, %v316, %v310
      %v322 = vperm.slane %v233, 2
      %v323 = vperm.slane %v234, 2
      %v324 = vperm.slane %v235, 2
      %v325 = vperm.slane %v236, 2
      %v326 = vmul.f32 %v321, %v322
      %v327 = vmul.f32 %v320, %v323
      %v328 = vmul.f32 %v319, %v324
      %v329 = vmul.f32 %v318, %v325
      %330 = vrot.lane.b32.xlu0 %v261, 1
      %v331 = vpop.permute.xlu0 %330
      %332 = vrot.lane.b32.xlu0 %v262, 1
      %v333 = vpop.permute.xlu0 %332
      %334 = vrot.lane.b32.xlu0 %v263, 1
      %v335 = vpop.permute.xlu0 %334
      %336 = vrot.lane.b32.xlu0 %v264, 1
      %v337 = vpop.permute.xlu0 %336
      %vm338 = vcmp.lt.s32.totalorder %v274, 1
      %v339 = vsel %vm338, %v335, %v337
      %v340 = vsel %vm338, %v333, %v335
      %v341 = vsel %vm338, %v331, %v333
      %v342 = vsel %vm338, %v337, %v331
      %v343 = vperm.slane %v233, 3
      %v344 = vperm.slane %v234, 3
      %v345 = vperm.slane %v235, 3
      %v346 = vperm.slane %v236, 3
      %v347 = vmul.f32 %v342, %v343
      %v348 = vmul.f32 %v341, %v344
      %v349 = vmul.f32 %v340, %v345
      %v350 = vmul.f32 %v339, %v346
      %351 = vrot.lane.b32.xlu0 %v261, 127
      %v352 = vpop.permute.xlu0 %351
      %353 = vrot.lane.b32.xlu0 %v262, 127
      %v354 = vpop.permute.xlu0 %353
      %355 = vrot.lane.b32.xlu0 %v263, 127
      %v356 = vpop.permute.xlu0 %355
      %357 = vrot.lane.b32.xlu0 %v264, 127
      %v358 = vpop.permute.xlu0 %357
      %vm359 = vcmp.lt.s32.totalorder %v274, 127
      %v360 = vsel %vm359, %v356, %v358
      %v361 = vsel %vm359, %v354, %v356
      %v362 = vsel %vm359, %v352, %v354
      %v363 = vsel %vm359, %v358, %v352
      %v364 = vperm.slane %v233, 5
      %v365 = vperm.slane %v234, 5
      %v366 = vperm.slane %v235, 5
      %v367 = vperm.slane %v236, 5
      %v368 = vmul.f32 %v362, %v364
      %v369 = vmul.f32 %v361, %v365
      %v370 = vmul.f32 %v360, %v366
      %v371 = vmul.f32 %v363, %v367
      %372 = vrot.lane.b32.xlu0 %v261, 113
      %v373 = vpop.permute.xlu0 %372
      %374 = vrot.lane.b32.xlu0 %v262, 113
      %v375 = vpop.permute.xlu0 %374
      %376 = vrot.lane.b32.xlu0 %v263, 113
      %v377 = vpop.permute.xlu0 %376
      %378 = vrot.lane.b32.xlu0 %v264, 113
      %v379 = vpop.permute.xlu0 %378
      %vm380 = vcmp.lt.s32.totalorder %v274, 113
      %v381 = vsel %vm380, %v377, %v379
      %v382 = vsel %vm380, %v375, %v377
      %v383 = vsel %vm380, %v373, %v375
      %v384 = vsel %vm380, %v379, %v373
      %v385 = vperm.slane %v233, 6
      %v386 = vperm.slane %v234, 6
      %v387 = vperm.slane %v235, 6
      %v388 = vperm.slane %v236, 6
      %v389 = vmul.f32 %v383, %v385
      %v390 = vmul.f32 %v382, %v386
      %v391 = vmul.f32 %v381, %v387
      %v392 = vmul.f32 %v384, %v388
      %393 = vrot.lane.b32.xlu0 %v261, 112
      %v394 = vpop.permute.xlu0 %393
      %395 = vrot.lane.b32.xlu0 %v262, 112
      %v396 = vpop.permute.xlu0 %395
      %397 = vrot.lane.b32.xlu0 %v263, 112
      %v398 = vpop.permute.xlu0 %397
      %399 = vrot.lane.b32.xlu0 %v264, 112
      %v400 = vpop.permute.xlu0 %399
      %vm401 = vcmp.lt.s32.totalorder %v274, 112
      %v402 = vsel %vm401, %v398, %v400
      %v403 = vsel %vm401, %v396, %v398
      %v404 = vsel %vm401, %v394, %v396
      %v405 = vsel %vm401, %v400, %v394
      %v406 = vperm.slane %v233, 7
      %v407 = vperm.slane %v234, 7
      %v408 = vperm.slane %v235, 7
      %v409 = vperm.slane %v236, 7
      %v410 = vmul.f32 %v404, %v406
      %v411 = vmul.f32 %v403, %v407
      %v412 = vmul.f32 %v402, %v408
      %v413 = vmul.f32 %v405, %v409
      %414 = vrot.lane.b32.xlu0 %v261, 111
      %v415 = vpop.permute.xlu0 %414
      %416 = vrot.lane.b32.xlu0 %v262, 111
      %v417 = vpop.permute.xlu0 %416
      %418 = vrot.lane.b32.xlu0 %v263, 111
      %v419 = vpop.permute.xlu0 %418
      %420 = vrot.lane.b32.xlu0 %v264, 111
      %v421 = vpop.permute.xlu0 %420
      %vm422 = vcmp.lt.s32.totalorder %v274, 111
      %v423 = vsel %vm422, %v419, %v421
      %v424 = vsel %vm422, %v417, %v419
      %v425 = vsel %vm422, %v415, %v417
      %v426 = vsel %vm422, %v421, %v415
      %v427 = vperm.slane %v237, 0
      %v428 = vperm.slane %v238, 0
      %v429 = vperm.slane %v239, 0
      %v430 = vperm.slane %v240, 0
      %v431 = vmul.f32 %v425, %v427
      %v432 = vmul.f32 %v424, %v428
      %v433 = vmul.f32 %v423, %v429
      %v434 = vmul.f32 %v426, %v430
      %v435 = vpack.c.bf16 %v305, %v284
      %v436 = vpack.c.bf16 %v306, %v285
      %v437 = vpack.c.bf16 %v307, %v286
      %v438 = vpack.c.bf16 %v308, %v287
      %v439 = vpack.c.bf16 %v347, %v326
      %v440 = vpack.c.bf16 %v348, %v327
      %v441 = vpack.c.bf16 %v349, %v328
      %v442 = vpack.c.bf16 %v350, %v329
      %v443 = vpack.c.bf16 %v368, %v261
      %v444 = vpack.c.bf16 %v369, %v262
      %v445 = vpack.c.bf16 %v370, %v263
      %v446 = vpack.c.bf16 %v371, %v264
      %v447 = vpack.c.bf16 %v410, %v389
      %v448 = vpack.c.bf16 %v411, %v390
      %v449 = vpack.c.bf16 %v412, %v391
      %v450 = vpack.c.bf16 %v413, %v392
      %v451 = vpack.c.bf16 %v431, %v431
      %v452 = vpack.c.bf16 %v432, %v432
      %v453 = vpack.c.bf16 %v433, %v433
      %v454 = vpack.c.bf16 %v434, %v434
      %vm455 = vcmask 588800
      %v457 = vsel %vm455, %v242, 0
      %vm459 = vcmask 1043456
      %v461 = vsel %vm459, %v451, 0
      %v464 = vsel %vm459, %v452, 0
      %v467 = vsel %vm459, %v453, 0
      %v470 = vsel %vm459, %v454, 0
      %472 = vmatpush.bf16.msra.mxu0 0
      %473 = vmatpush.bf16.msra.mxu0 0
      %474 = vmatpush.bf16.msra.mxu0 0
      %475 = vmatpush.bf16.msra.mxu0 %v461
      %476 = vmatpush.bf16.msra.mxu0 %v447
      %477 = vmatpush.bf16.msra.mxu0 %v443
      %478 = vmatpush.bf16.msra.mxu0 %v439
      %479 = vmatpush.bf16.msra.mxu0 %v435
      %480 = vmatmul.bf16.gmra.mxu0 %v457
      %v481 = vpop.f32.mrf.mxu0
      %v482 = vadd.f32 0.0, %v481
      %v483 = vpop.f32.mrf.mxu0
      %484 = vdwg.mxu0
      %485 = vmatpush.bf16.msra.mxu0 0
      %486 = vmatpush.bf16.msra.mxu0 0
      %487 = vmatpush.bf16.msra.mxu0 0
      %488 = vmatpush.bf16.msra.mxu0 %v464
      %489 = vmatpush.bf16.msra.mxu0 %v448
      %490 = vmatpush.bf16.msra.mxu0 %v444
      %491 = vmatpush.bf16.msra.mxu0 %v440
      %492 = vmatpush.bf16.msra.mxu0 %v436
      %493 = vmatmul.bf16.gmra.mxu0 %v457
      %v494 = vpop.f32.mrf.mxu0
      %v495 = vadd.f32 0.0, %v494
      %v496 = vpop.f32.mrf.mxu0
      %497 = vdwg.mxu0
      %498 = vmatpush.bf16.msra.mxu0 0
      %499 = vmatpush.bf16.msra.mxu0 0
      %500 = vmatpush.bf16.msra.mxu0 0
      %501 = vmatpush.bf16.msra.mxu0 %v467
      %502 = vmatpush.bf16.msra.mxu0 %v449
      %503 = vmatpush.bf16.msra.mxu0 %v445
      %504 = vmatpush.bf16.msra.mxu0 %v441
      %505 = vmatpush.bf16.msra.mxu0 %v437
      %506 = vmatmul.bf16.gmra.mxu0 %v457
      %v507 = vpop.f32.mrf.mxu0
      %v508 = vadd.f32 0.0, %v507
      %v509 = vpop.f32.mrf.mxu0
      %510 = vdwg.mxu0
      %511 = vmatpush.bf16.msra.mxu0 0
      %512 = vmatpush.bf16.msra.mxu0 0
      %513 = vmatpush.bf16.msra.mxu0 0
      %514 = vmatpush.bf16.msra.mxu0 %v470
      %515 = vmatpush.bf16.msra.mxu0 %v450
      %516 = vmatpush.bf16.msra.mxu0 %v446
      %517 = vmatpush.bf16.msra.mxu0 %v442
      %518 = vmatpush.bf16.msra.mxu0 %v438
      %519 = vmatmul.bf16.gmra.mxu0 %v457
      %v520 = vpop.f32.mrf.mxu0
      %v521 = vadd.f32 0.0, %v520
      %v522 = vpop.f32.mrf.mxu0
      %523 = vdwg.mxu0
      %524 = vset.pattern.permute.xlu0 2
      %525 = vperm.xlu0 %524, %v241
      %v526 = vpop.permute.xlu0 %525
      %v528 = vmul.f32 %v482, %v526
      %v529 = vmul.f32 %v495, %v526
      %v530 = vmul.f32 %v508, %v526
      %v531 = vmul.f32 %v521, %v526
      %532 = vset.pattern.permute.xlu0 3
      %533 = vperm.xlu0 %532, %v241
      %v534 = vpop.permute.xlu0 %533
      %v536 = vadd.f32 %v528, %v534
      %v537 = vadd.f32 %v529, %v534
      %v538 = vadd.f32 %v530, %v534
      %v539 = vadd.f32 %v531, %v534
      %v540 = vmax.f32 %v536, 0.0
      %v541 = vmax.f32 %v537, 0.0
      %v542 = vmax.f32 %v538, 0.0
      %v543 = vmax.f32 %v539, 0.0
      %544 = vrot.lane.b32.xlu0 %v540, 17
      %v545 = vpop.permute.xlu0 %544
      %546 = vrot.lane.b32.xlu0 %v541, 17
      %v547 = vpop.permute.xlu0 %546
      %548 = vrot.lane.b32.xlu0 %v542, 17
      %v549 = vpop.permute.xlu0 %548
      %550 = vrot.lane.b32.xlu0 %v543, 17
      %v551 = vpop.permute.xlu0 %550
      %v552 = vsel %vm275, %v549, %v551
      %v553 = vsel %vm275, %v547, %v549
      %v554 = vsel %vm275, %v545, %v547
      %v555 = vsel %vm275, %v551, %v545
      %v556 = vmul.f32 %v555, %v280
      %v557 = vmul.f32 %v554, %v281
      %v558 = vmul.f32 %v553, %v282
      %v559 = vmul.f32 %v552, %v283
      %560 = vrot.lane.b32.xlu0 %v540, 16
      %v561 = vpop.permute.xlu0 %560
      %562 = vrot.lane.b32.xlu0 %v541, 16
      %v563 = vpop.permute.xlu0 %562
      %564 = vrot.lane.b32.xlu0 %v542, 16
      %v565 = vpop.permute.xlu0 %564
      %566 = vrot.lane.b32.xlu0 %v543, 16
      %v567 = vpop.permute.xlu0 %566
      %v568 = vsel %vm296, %v565, %v567
      %v569 = vsel %vm296, %v563, %v565
      %v570 = vsel %vm296, %v561, %v563
      %v571 = vsel %vm296, %v567, %v561
      %v572 = vmul.f32 %v571, %v301
      %v573 = vmul.f32 %v570, %v302
      %v574 = vmul.f32 %v569, %v303
      %v575 = vmul.f32 %v568, %v304
      %576 = vrot.lane.b32.xlu0 %v540, 15
      %v577 = vpop.permute.xlu0 %576
      %578 = vrot.lane.b32.xlu0 %v541, 15
      %v579 = vpop.permute.xlu0 %578
      %580 = vrot.lane.b32.xlu0 %v542, 15
      %v581 = vpop.permute.xlu0 %580
      %582 = vrot.lane.b32.xlu0 %v543, 15
      %v583 = vpop.permute.xlu0 %582
      %v584 = vsel %vm317, %v581, %v583
      %v585 = vsel %vm317, %v579, %v581
      %v586 = vsel %vm317, %v577, %v579
      %v587 = vsel %vm317, %v583, %v577
      %v588 = vmul.f32 %v587, %v322
      %v589 = vmul.f32 %v586, %v323
      %v590 = vmul.f32 %v585, %v324
      %v591 = vmul.f32 %v584, %v325
      %592 = vrot.lane.b32.xlu0 %v540, 1
      %v593 = vpop.permute.xlu0 %592
      %594 = vrot.lane.b32.xlu0 %v541, 1
      %v595 = vpop.permute.xlu0 %594
      %596 = vrot.lane.b32.xlu0 %v542, 1
      %v597 = vpop.permute.xlu0 %596
      %598 = vrot.lane.b32.xlu0 %v543, 1
      %v599 = vpop.permute.xlu0 %598
      %v600 = vsel %vm338, %v597, %v599
      %v601 = vsel %vm338, %v595, %v597
      %v602 = vsel %vm338, %v593, %v595
      %v603 = vsel %vm338, %v599, %v593
      %v604 = vmul.f32 %v603, %v343
      %v605 = vmul.f32 %v602, %v344
      %v606 = vmul.f32 %v601, %v345
      %v607 = vmul.f32 %v600, %v346
      %608 = vrot.lane.b32.xlu0 %v540, 127
      %v609 = vpop.permute.xlu0 %608
      %610 = vrot.lane.b32.xlu0 %v541, 127
      %v611 = vpop.permute.xlu0 %610
      %612 = vrot.lane.b32.xlu0 %v542, 127
      %v613 = vpop.permute.xlu0 %612
      %614 = vrot.lane.b32.xlu0 %v543, 127
      %v615 = vpop.permute.xlu0 %614
      %v616 = vsel %vm359, %v613, %v615
      %v617 = vsel %vm359, %v611, %v613
      %v618 = vsel %vm359, %v609, %v611
      %v619 = vsel %vm359, %v615, %v609
      %v620 = vmul.f32 %v618, %v364
      %v621 = vmul.f32 %v617, %v365
      %v622 = vmul.f32 %v616, %v366
      %v623 = vmul.f32 %v619, %v367
      %624 = vrot.lane.b32.xlu0 %v540, 113
      %v625 = vpop.permute.xlu0 %624
      %626 = vrot.lane.b32.xlu0 %v541, 113
      %v627 = vpop.permute.xlu0 %626
      %628 = vrot.lane.b32.xlu0 %v542, 113
      %v629 = vpop.permute.xlu0 %628
      %630 = vrot.lane.b32.xlu0 %v543, 113
      %v631 = vpop.permute.xlu0 %630
      %v632 = vsel %vm380, %v629, %v631
      %v633 = vsel %vm380, %v627, %v629
      %v634 = vsel %vm380, %v625, %v627
      %v635 = vsel %vm380, %v631, %v625
      %v636 = vmul.f32 %v634, %v385
      %v637 = vmul.f32 %v633, %v386
      %v638 = vmul.f32 %v632, %v387
      %v639 = vmul.f32 %v635, %v388
      %640 = vrot.lane.b32.xlu0 %v540, 112
      %v641 = vpop.permute.xlu0 %640
      %642 = vrot.lane.b32.xlu0 %v541, 112
      %v643 = vpop.permute.xlu0 %642
      %644 = vrot.lane.b32.xlu0 %v542, 112
      %v645 = vpop.permute.xlu0 %644
      %646 = vrot.lane.b32.xlu0 %v543, 112
      %v647 = vpop.permute.xlu0 %646
      %v648 = vsel %vm401, %v645, %v647
      %v649 = vsel %vm401, %v643, %v645
      %v650 = vsel %vm401, %v641, %v643
      %v651 = vsel %vm401, %v647, %v641
      %v652 = vmul.f32 %v650, %v406
      %v653 = vmul.f32 %v649, %v407
      %v654 = vmul.f32 %v648, %v408
      %v655 = vmul.f32 %v651, %v409
      %656 = vrot.lane.b32.xlu0 %v540, 111
      %v657 = vpop.permute.xlu0 %656
      %658 = vrot.lane.b32.xlu0 %v541, 111
      %v659 = vpop.permute.xlu0 %658
      %660 = vrot.lane.b32.xlu0 %v542, 111
      %v661 = vpop.permute.xlu0 %660
      %662 = vrot.lane.b32.xlu0 %v543, 111
      %v663 = vpop.permute.xlu0 %662
      %v664 = vsel %vm422, %v661, %v663
      %v665 = vsel %vm422, %v659, %v661
      %v666 = vsel %vm422, %v657, %v659
      %v667 = vsel %vm422, %v663, %v657
      %v668 = vmul.f32 %v666, %v427
      %v669 = vmul.f32 %v665, %v428
      %v670 = vmul.f32 %v664, %v429
      %v671 = vmul.f32 %v667, %v430
      %v672 = vpack.c.bf16 %v572, %v556
      %v673 = vpack.c.bf16 %v573, %v557
      %v674 = vpack.c.bf16 %v574, %v558
      %v675 = vpack.c.bf16 %v575, %v559
      %v676 = vpack.c.bf16 %v604, %v588
      %v677 = vpack.c.bf16 %v605, %v589
      %v678 = vpack.c.bf16 %v606, %v590
      %v679 = vpack.c.bf16 %v607, %v591
      %v680 = vpack.c.bf16 %v620, %v540
      %v681 = vpack.c.bf16 %v621, %v541
      %v682 = vpack.c.bf16 %v622, %v542
      %v683 = vpack.c.bf16 %v623, %v543
      %v684 = vpack.c.bf16 %v652, %v636
      %v685 = vpack.c.bf16 %v653, %v637
      %v686 = vpack.c.bf16 %v654, %v638
      %v687 = vpack.c.bf16 %v655, %v639
      %v688 = vpack.c.bf16 %v668, %v668
      %v689 = vpack.c.bf16 %v669, %v669
      %v690 = vpack.c.bf16 %v670, %v670
      %v691 = vpack.c.bf16 %v671, %v671
      %692 = vset.pattern.permute.xlu0 4
      %693 = vperm.xlu0 %692, %v241
      %v694 = vpop.permute.xlu0 %693
      %v697 = vsel %vm455, %v243, 0
      %v700 = vsel %vm459, %v688, 0
      %v703 = vsel %vm459, %v689, 0
      %v706 = vsel %vm459, %v690, 0
      %v709 = vsel %vm459, %v691, 0
      %711 = vmatpush.bf16.msra.mxu0 0
      %712 = vmatpush.bf16.msra.mxu0 0
      %713 = vmatpush.bf16.msra.mxu0 0
      %714 = vmatpush.bf16.msra.mxu0 %v700
      %715 = vmatpush.bf16.msra.mxu0 %v684
      %716 = vmatpush.bf16.msra.mxu0 %v680
      %717 = vmatpush.bf16.msra.mxu0 %v676
      %718 = vmatpush.bf16.msra.mxu0 %v672
      %719 = vmatmul.bf16.gmra.mxu0 %v697
      %v720 = vpop.f32.mrf.mxu0
      %v721 = vadd.f32 %v694, %v720
      %v722 = vpop.f32.mrf.mxu0
      %723 = vdwg.mxu0
      %724 = vmatpush.bf16.msra.mxu0 0
      %725 = vmatpush.bf16.msra.mxu0 0
      %726 = vmatpush.bf16.msra.mxu0 0
      %727 = vmatpush.bf16.msra.mxu0 %v703
      %728 = vmatpush.bf16.msra.mxu0 %v685
      %729 = vmatpush.bf16.msra.mxu0 %v681
      %730 = vmatpush.bf16.msra.mxu0 %v677
      %731 = vmatpush.bf16.msra.mxu0 %v673
      %732 = vmatmul.bf16.gmra.mxu0 %v697
      %v733 = vpop.f32.mrf.mxu0
      %v734 = vadd.f32 %v694, %v733
      %v735 = vpop.f32.mrf.mxu0
      %736 = vdwg.mxu0
      %737 = vmatpush.bf16.msra.mxu0 0
      %738 = vmatpush.bf16.msra.mxu0 0
      %739 = vmatpush.bf16.msra.mxu0 0
      %740 = vmatpush.bf16.msra.mxu0 %v706
      %741 = vmatpush.bf16.msra.mxu0 %v686
      %742 = vmatpush.bf16.msra.mxu0 %v682
      %743 = vmatpush.bf16.msra.mxu0 %v678
      %744 = vmatpush.bf16.msra.mxu0 %v674
      %745 = vmatmul.bf16.gmra.mxu0 %v697
      %v746 = vpop.f32.mrf.mxu0
      %v747 = vadd.f32 %v694, %v746
      %v748 = vpop.f32.mrf.mxu0
      %749 = vdwg.mxu0
      %750 = vmatpush.bf16.msra.mxu0 0
      %751 = vmatpush.bf16.msra.mxu0 0
      %752 = vmatpush.bf16.msra.mxu0 0
      %753 = vmatpush.bf16.msra.mxu0 %v709
      %754 = vmatpush.bf16.msra.mxu0 %v687
      %755 = vmatpush.bf16.msra.mxu0 %v683
      %756 = vmatpush.bf16.msra.mxu0 %v679
      %757 = vmatpush.bf16.msra.mxu0 %v675
      %758 = vmatmul.bf16.gmra.mxu0 %v697
      %v759 = vpop.f32.mrf.mxu0
      %v760 = vadd.f32 %v694, %v759
      %v761 = vpop.f32.mrf.mxu0
      %762 = vdwg.mxu0
      %v763 = vadd.f32 %v229, %v721
      %v764 = vadd.f32 %v230, %v734
      %v765 = vadd.f32 %v231, %v747
      %v766 = vadd.f32 %v232, %v760
      %767 = vst [vmem:[%s226] sm:$0xff] %v763
      %768 = vst [vmem:[%s226 + $0x8] sm:$0xff] %v764
      %769 = vst [vmem:[%s226 + $0x10] sm:$0xff] %v765
      %770 = vst [vmem:[%s226 + $0x18] sm:$0xff] %v766
      %s771 = smul.u32 4, %s16
      %p772 = scmp.lt.s32.totalorder %s771, 7
      %s773 = scalar_select %p772, %s771, 7
      %s774 = smul.addr %s773, 8
      %s775 = scalar_lea.vmem %s5, %s774
      // Predicated region
      $region41: #{unit_forward.1} parent=39 // pred_check
        %p776 = pneg %p144
      $region42: #{unit_forward.1} parent=39 // pred_check_branch
        %778 = sbr.rel (%p776) target = $region44
      $region43: #{unit_forward.1} parent=39 // pred_region
        %s779 = smul.u32 4, %s16
      $region44: #{unit_forward.1} parent=39 // pred_fallthru
        _
    $region40: #{unit_forward.1} parent=5 // pred_fallthru
      _
    %p780 = scmp.le.s32.totalorder 2, %s11
    // Predicated region
    $region45: #{unit_forward.1} parent=5 // pred_check
      %p781 = pneg %p780
    $region46: #{unit_forward.1} parent=5 // pred_check_branch
      %783 = sbr.rel (%p781) target = $region48
    $region47: #{unit_forward.1} parent=5 // pred_region
      %s784 = ssub.s32 %s11, 2
      // Predicated region
      $region49: #{unit_forward.1} parent=47 // pred_check
        %p785 = pneg %p150
      $region50: #{unit_forward.1} parent=47 // pred_check_branch
        %787 = sbr.rel (%p785) target = $region52
      $region51: #{unit_forward.1} parent=47 // pred_region
        %s788 = smul.u32 4, %s17
        %p789 = scmp.lt.s32.totalorder %s788, 7
        %s790 = scalar_select %p789, %s788, 7
        %s791 = smul.addr %s790, 8
        %s792 = scalar_lea.vmem %s5, %s791
      $region52: #{unit_forward.1} parent=47 // pred_fallthru
        _
    $region48: #{unit_forward.1} parent=5 // pred_fallthru
      _
  $region6: #{unit_forward.1} parent=0 // loop_footer
    %s15 = sadd.s32 1, %s11
  $region7: #{unit_forward.1} parent=0 // loop_footer_branch
    %10 = sbr.rel target = $region3
  $region8: #{unit_forward.1} parent=0 // loop_exit
    _

</llo_original>
